<compile_context>
chip_gen: v7x
topology: tpu7x:2x2x1
jax: 0.10.0
libtpu: 0.0.40
codegen_flags: <defaults>
</compile_context>

<pallas_src>
import jax
import jax.numpy as jnp
from jax.experimental import pallas as pl
from jax.experimental.pallas import tpu as pltpu


def _log_softmax_rows(y):
    # Numerically stable log_softmax along axis=1 (rows are independent, so the
    # reduction never crosses a batch tile).
    m = jnp.max(y, axis=1, keepdims=True)
    shifted = y - m
    lse = jnp.log(jnp.sum(jnp.exp(shifted), axis=1, keepdims=True))
    return shifted - lse


def _make_net_kernel(use_scalar_fma):
    if use_scalar_fma:
        # Actual Net shape (in_features = out_features = 1): a (TB,1)x(1,1)
        # matmul would waste a whole MXU tile and still pay push/pop latency,
        # so do the linear layer as one VPU FMA with w, b read from SMEM.
        def kernel(wb_ref, x_ref, o_ref):
            w = wb_ref[0]
            b = wb_ref[1]
            y = x_ref[...] * w + b                              # (TB, 1)
            o_ref[...] = _log_softmax_rows(y).astype(o_ref.dtype)
        return kernel

    # General path (non-degenerate F, D): contract x (TB, F) directly against
    # the PyTorch-layout weight (D, F) — no transpose copy in the wrapper.
    def kernel(w_ref, b_ref, x_ref, o_ref):
        y = jax.lax.dot_general(
            x_ref[...], w_ref[...],
            dimension_numbers=(((1,), (1,)), ((), ())),
            preferred_element_type=jnp.float32,
        ) + b_ref[...]                                          # (TB, D)
        o_ref[...] = _log_softmax_rows(y).astype(o_ref.dtype)
    return kernel


def _pick_batch_tile(B, F, D):
    """Largest 8-aligned row tile that comfortably fits VMEM on every chip.

    Budget is conservative for v7x (64 MiB physical / 32 MiB scoped default);
    v5e/v6e have strictly more headroom, so the same tile is always safe.
    """
    if B <= 8:
        return B
    budget = 8 * 1024 * 1024                 # bytes reserved for pipelined tiles
    per_row = 4 * (F + D) * 2                # f32, double-buffered x + out tiles
    tb = budget // max(per_row, 1)
    tb = min(tb, B, 1024)
    return max(8, (tb // 8) * 8)


def net_forward(x, w, b, *, tb=None):
    """Pallas equivalent of Net.forward.

    x: (B, ...) — flattened from dim 1 (as torch.flatten(x, 1)).
    w: (out_features, in_features) PyTorch-layout weight (NOT transposed here).
    b: (out_features,) bias.
    """
    B = x.shape[0]
    x2d = x.reshape(B, -1).astype(jnp.float32)      # torch.flatten(x, 1)
    F = x2d.shape[1]
    D = w.shape[0]
    assert w.shape == (D, F), (w.shape, (D, F))

    if tb is None:
        tb = _pick_batch_tile(B, F, D)
    assert tb == B or (tb % 8 == 0 and tb <= B), "row tile must be 8-aligned"
    grid = (pl.cdiv(B, tb),)

    cost = pl.CostEstimate(
        flops=2 * B * F * D,
        transcendentals=2 * B * D,
        bytes_accessed=4 * (B * F + D * F + D + B * D),
    )
    cparams = pltpu.CompilerParams(
        # Row tiles are fully independent -> megacore can shard them (v7x).
        dimension_semantics=("parallel",),
        vmem_limit_bytes=32 * 1024 * 1024,   # within scoped limits on v5e/v6e/v7x
    )

    use_scalar_fma = (F == 1 and D == 1)
    kernel = _make_net_kernel(use_scalar_fma)

    if use_scalar_fma:
        # Pack w and b as two SMEM scalars: no VMEM vreg, no per-step DMA.
        wb = jnp.concatenate([w.reshape(-1), b.reshape(-1)]).astype(jnp.float32)
        in_specs = [
            pl.BlockSpec(memory_space=pltpu.MemorySpace.SMEM),     # (2,) scalars
            pl.BlockSpec((tb, F), lambda i: (i, 0)),               # x row tile
        ]
        args = (wb, x2d)
    else:
        w_f32 = w.astype(jnp.float32)
        b2d = b.reshape(1, D).astype(jnp.float32)
        in_specs = [
            pl.BlockSpec((D, F), lambda i: (0, 0)),   # W resident across row tiles
            pl.BlockSpec((1, D), lambda i: (0, 0)),   # bias resident
            pl.BlockSpec((tb, F), lambda i: (i, 0)),  # x row tile (double-buffered)
        ]
        args = (w_f32, b2d, x2d)

    return pl.pallas_call(
        kernel,
        out_shape=jax.ShapeDtypeStruct((B, D), jnp.float32),
        grid_spec=pltpu.PrefetchScalarGridSpec(
            num_scalar_prefetch=0,
            grid=grid,
            in_specs=in_specs,
            out_specs=pl.BlockSpec((tb, D), lambda i: (i, 0)),
        ),
        compiler_params=cparams,
        cost_estimate=cost,
    )(*args)


if __name__ == "__main__":
    key = jax.random.PRNGKey(0)
    kx, kw, kb = jax.random.split(key, 3)

    # --- Primary check: the literal Net (fc1 = nn.Linear(1, 1)) -------------
    # Flattened feature dim must be 1; use a (B, 1, 1, 1) input.
    B = 256
    x = jax.random.normal(kx, (B, 1, 1, 1), dtype=jnp.float32)
    bound = 1.0  # PyTorch init bound = 1/sqrt(in_features) = 1
    w = jax.random.uniform(kw, (1, 1), minval=-bound, maxval=bound,
                           dtype=jnp.float32)        # (out_features, in_features)
    b = jax.random.uniform(kb, (1,), minval=-bound, maxval=bound,
                           dtype=jnp.float32)

    # tb=64 forces a 4-step grid so the tiled/pipelined path is exercised even
    # at this tiny demo size (the auto-pick would use a single 256-row tile).
    out = net_forward(x, w, b, tb=64)
    jax.block_until_ready(out)

    x2d = x.reshape(B, -1)
    ref = jax.nn.log_softmax(x2d @ w.T + b, axis=1)
    assert out.shape == (B, 1)
    assert jnp.allclose(out, ref, atol=1e-5), (out, ref)

    # --- Secondary check: general fallback path (dot_general, resident W) ---
    F2, D2 = 8, 16
    x2 = jax.random.normal(kx, (64, F2), dtype=jnp.float32)
    w2 = jax.random.normal(kw, (D2, F2), dtype=jnp.float32) * 0.1
    b2 = jax.random.normal(kb, (D2,), dtype=jnp.float32) * 0.1
    out2 = net_forward(x2, w2, b2, tb=32)
    jax.block_until_ready(out2)
    ref2 = jax.nn.log_softmax(
        jnp.dot(x2, w2.T, precision=jax.lax.Precision.HIGHEST) + b2, axis=1)
    assert out2.shape == (64, D2)
    assert jnp.allclose(out2, ref2, atol=2e-3, rtol=2e-3)

    print("KERNEL_OK")
</pallas_src>

<mosaic_0001>
module attributes {stable_mosaic.version = 11 : i64} {
  func.func @kernel(%arg0: i32, %arg1: memref<2xf32, #tpu.memory_space<smem>>, %arg2: memref<64x1xf32, #tpu.memory_space<vmem>>, %arg3: memref<64x1xf32, #tpu.memory_space<vmem>>) attributes {dimension_semantics = [#tpu.dimension_semantics<parallel>], iteration_bounds = array<i64: 4>, scalar_prefetch = 0 : i64, scratch_operands = 0 : i64, tpu.core_type = #tpu.core_type<tc>, window_params = [{transform_indices = @transform_0, window_bounds = array<i64: 2>}, {transform_indices = @transform_1, window_bounds = array<i64: 64, 1>}, {transform_indices = @transform_2, window_bounds = array<i64: 64, 1>}]} {
    %c0 = arith.constant 0 : index
    %0 = memref.load %arg1[%c0] : memref<2xf32, #tpu.memory_space<smem>>
    %c1 = arith.constant 1 : index
    %1 = memref.load %arg1[%c1] : memref<2xf32, #tpu.memory_space<smem>>
    %c0_0 = arith.constant 0 : index
    %c0_1 = arith.constant 0 : index
    %2 = vector.load %arg2[%c0_0, %c0_1] : memref<64x1xf32, #tpu.memory_space<vmem>>, vector<64x1xf32>
    %3 = vector.broadcast %0 : f32 to vector<64x1xf32>
    %4 = arith.mulf %2, %3 : vector<64x1xf32>
    %5 = vector.broadcast %1 : f32 to vector<64x1xf32>
    %6 = arith.addf %4, %5 : vector<64x1xf32>
    %cst = arith.constant dense<0xFF800000> : vector<64xf32>
    %7 = vector.multi_reduction <maximumf>, %6, %cst [1] : vector<64x1xf32> to vector<64xf32>
    %8 = vector.shape_cast %7 : vector<64xf32> to vector<64x1xf32>
    %9 = arith.subf %6, %8 : vector<64x1xf32>
    %10 = math.exp %9 : vector<64x1xf32>
    %cst_2 = arith.constant dense<0.000000e+00> : vector<64xf32>
    %11 = vector.multi_reduction <add>, %10, %cst_2 [1] : vector<64x1xf32> to vector<64xf32>
    %12 = vector.shape_cast %11 : vector<64xf32> to vector<64x1xf32>
    %13 = math.log %12 : vector<64x1xf32>
    %14 = arith.subf %9, %13 : vector<64x1xf32>
    %c0_3 = arith.constant 0 : index
    %c0_4 = arith.constant 0 : index
    %15 = vector.load %arg3[%c0_3, %c0_4] : memref<64x1xf32, #tpu.memory_space<vmem>>, vector<64x1xf32>
    tpu.vector_store %arg3[%c0_3, %c0_4], %14 {strides = array<i32>} : memref<64x1xf32, #tpu.memory_space<vmem>>, vector<64x1xf32>,
    return
  }
  func.func @transform_0(%arg0: i32) -> i32 {
    %c0_i32 = arith.constant 0 : i32
    %c0_i32_0 = arith.constant 0 : i32
    return %c0_i32 : i32
  }
  func.func @transform_1(%arg0: i32) -> (i32, i32) {
    %c0_i32 = arith.constant 0 : i32
    %c0_i32_0 = arith.constant 0 : i32
    return %arg0, %c0_i32 : i32, i32
  }
  func.func @transform_2(%arg0: i32) -> (i32, i32) {
    %c0_i32 = arith.constant 0 : i32
    %c0_i32_0 = arith.constant 0 : i32
    return %arg0, %c0_i32 : i32, i32
  }
}

</mosaic_0001>

<llo_original>
// kernel: tpu_custom_call.1
$region0: #{tpu_custom_call.1}
  #allocation0 [shape = 'u32[]', space=smem, size = 0x4, offset = 0x4, fixed_abs, tag = 'smem constant byte address 0x4 - core index']
  #allocation1 [shape = 'u32[144,128]{1,0:T(1,128)}', space=vmem, size = 0x12000, scoped, tag = 'internal scratch']
  %s0 = inlined_call_operand.vmem [shape: f32[2], index: 0, kind: input, shape index: {}]
  %s1 = inlined_call_operand.vmem [shape: f32[256,1], index: 1, kind: input, shape index: {}]
  %s2 = inlined_call_operand.vmem [shape: f32[256,1], index: 2, kind: output, shape index: {}]
  %s3 = sld [smem:[#allocation0]]
  $region45: #{tpu_custom_call.1} parent=0
    _
  %s5 = ssub.s32 1, %s3
  %s6 = scalar_select 0, %s5, %s3
  $region1: #{tpu_custom_call.1} parent=0
    #allocation2 [shape = 'u8[512]{0}', space=smem, size = 0x200, scoped, tag = 'input window, operand 0, single buffered']
    #allocation3 [shape = 's32[2]{0}', space=sflag, size = 0x8, scoped, tag = 'scoped memory for tpu_custom_call.1']
    %7 = vsyncpa [#allocation3], 0
    loop: start=0, step=1, limit=6
    $region2: #{tpu_custom_call.1} parent=1 // loop_pre_header
      _
    $region3: #{tpu_custom_call.1} parent=1 // loop_header
      %s9 = sphi 0, %s13
      %p10 = scmp.ge.s32.totalorder %s9, 6
      %s17 = sphi 0, %s17
      %s19 = sphi 0, %s17
      %s20 = sphi 0, %s19
      %s34 = sphi 0, %s20
      %s40 = sphi 0, %s42
      %s43 = sphi 0, %s40
      %s44 = sphi 0, %s43
      %s60 = sphi 0, %s44
      %s66 = sphi 0, %s68
      %s69 = sphi 0, %s66
      %s70 = sphi 0, %s69
      %s86 = sphi 0, %s70
    $region4: #{tpu_custom_call.1} parent=1 // loop_header_branch
      %12 = sbr.rel (%p10) target = $region8
    $region5: #{tpu_custom_call.1} parent=1 // loop_body
      %s14 = ssub.s32 %s9, 1
      %s15 = ssub.s32 %s9, 2
      %s16 = sadd.s32 %s9, 1
      %s18 = sadd.s32 %s17, 1
      %p21 = scmp.eq.s32.totalorder %s9, 3
      %p22 = scmp.ne.s32.totalorder %s17, %s19
      %p23 = scmp.eq.s32.totalorder %s9, 0
      %p24 = por %p22, %p23
      %p25 = scmp.ne.s32.totalorder %s17, %s19
      %p26 = scmp.eq.s32.totalorder %s14, 3
      %p27 = por %p25, %p26
      %p28 = scmp.ne.s32.totalorder %s19, %s20
      %p29 = scmp.eq.s32.totalorder %s14, 0
      %p30 = por %p28, %p29
      %p31 = scmp.ne.s32.totalorder %s19, %s20
      %p32 = scmp.eq.s32.totalorder %s15, 3
      %p33 = por %p31, %p32
      %p35 = scmp.ne.s32.totalorder %s20, %s34
      %p36 = scmp.eq.s32.totalorder %s15, 0
      %p37 = por %p35, %p36
      %s38 = ssub.s32 %s9, %s16
      %p39 = scmp.eq.s32.totalorder %s38, 0
      %s41 = sadd.s32 %s40, 1
      %s42 = scalar_select %p39, %s40, %s41
      %p45 = pneg %p39
      %p46 = scmp.eq.s32.totalorder %s9, 3
      %p47 = por %p45, %p46
      %p48 = scmp.ne.s32.totalorder %s40, %s43
      %p49 = scmp.eq.s32.totalorder %s9, 0
      %p50 = por %p48, %p49
      %p51 = scmp.ne.s32.totalorder %s40, %s43
      %p52 = scmp.eq.s32.totalorder %s14, 3
      %p53 = por %p51, %p52
      %p54 = scmp.ne.s32.totalorder %s43, %s44
      %p55 = scmp.eq.s32.totalorder %s14, 0
      %p56 = por %p54, %p55
      %p57 = scmp.ne.s32.totalorder %s43, %s44
      %p58 = scmp.eq.s32.totalorder %s15, 3
      %p59 = por %p57, %p58
      %p61 = scmp.ne.s32.totalorder %s44, %s60
      %p62 = scmp.eq.s32.totalorder %s15, 0
      %p63 = por %p61, %p62
      %s64 = ssub.s32 %s9, %s16
      %p65 = scmp.eq.s32.totalorder %s64, 0
      %s67 = sadd.s32 %s66, 1
      %s68 = scalar_select %p65, %s66, %s67
      %p71 = pneg %p65
      %p72 = scmp.eq.s32.totalorder %s9, 3
      %p73 = por %p71, %p72
      %p74 = scmp.ne.s32.totalorder %s66, %s69
      %p75 = scmp.eq.s32.totalorder %s9, 0
      %p76 = por %p74, %p75
      %p77 = scmp.ne.s32.totalorder %s66, %s69
      %p78 = scmp.eq.s32.totalorder %s14, 3
      %p79 = por %p77, %p78
      %p80 = scmp.ne.s32.totalorder %s69, %s70
      %p81 = scmp.eq.s32.totalorder %s14, 0
      %p82 = por %p80, %p81
      %p83 = scmp.ne.s32.totalorder %s69, %s70
      %p84 = scmp.eq.s32.totalorder %s15, 3
      %p85 = por %p83, %p84
      %p87 = scmp.ne.s32.totalorder %s70, %s86
      %p88 = scmp.eq.s32.totalorder %s15, 0
      %p89 = por %p87, %p88
      %p90 = scmp.le.s32.totalorder 1, %s9
      %p91 = scmp.lt.s32.totalorder %s9, 5
      %p92 = pnand %p90, %p91
      %p93 = pneg %p92
      // Predicated region
      $region9: #{tpu_custom_call.1} parent=5 // pred_check
        _
      $region10: #{tpu_custom_call.1} parent=5 // pred_check_branch
        %95 = sbr.rel (%p92) target = $region12
      $region11: #{tpu_custom_call.1} parent=5 // pred_region
        %s96 = ssub.s32 %s9, 1
        // Predicated region
        $region13: #{tpu_custom_call.1} parent=11 // pred_check
          %p97 = pneg %p30
        $region14: #{tpu_custom_call.1} parent=11 // pred_check_branch
          %99 = sbr.rel (%p97) target = $region16
        $region15: #{tpu_custom_call.1} parent=11 // pred_region
          %s101 = ssub.s32 16, 16
          %102 = vsyncadd [#allocation3], %s101
          %s104 = sshll.u32 %s0, 4
          %s105 = int_to_ptr.vmem [resolvable:$true] %s104
          %107 = dma.vmem_to_smem %s105, 16, [#allocation2], [#allocation3]
        $region16: #{tpu_custom_call.1} parent=11 // pred_fallthru
          _
      $region12: #{tpu_custom_call.1} parent=5 // pred_fallthru
        _
      %p108 = scmp.lt.s32.totalorder %s9, 4
      // Predicated region
      $region17: #{tpu_custom_call.1} parent=5 // pred_check
        %p109 = pneg %p108
      $region18: #{tpu_custom_call.1} parent=5 // pred_check_branch
        %111 = sbr.rel (%p109) target = $region20
      $region19: #{tpu_custom_call.1} parent=5 // pred_region
        // Predicated region
        $region21: #{tpu_custom_call.1} parent=19 // pred_check
          %p112 = pneg %p50
        $region22: #{tpu_custom_call.1} parent=19 // pred_check_branch
          %114 = sbr.rel (%p112) target = $region24
        $region23: #{tpu_custom_call.1} parent=19 // pred_region
          %s115 = smul.u32 8, %s9
          %p116 = scmp.lt.s32.totalorder %s115, 31
          %s117 = scalar_select %p116, %s115, 31
          %s118 = smul.addr %s117, 8
          %s119 = scalar_lea.vmem %s1, %s118
          %s120 = smul.u32 8, %s9
        $region24: #{tpu_custom_call.1} parent=19 // pred_fallthru
          _
      $region20: #{tpu_custom_call.1} parent=5 // pred_fallthru
        _
      %p121 = scmp.le.s32.totalorder 1, %s9
      %p122 = scmp.lt.s32.totalorder %s9, 5
      %p123 = pnand %p121, %p122
      %p124 = pneg %p123
      // Predicated region
      $region25: #{tpu_custom_call.1} parent=5 // pred_check
        _
      $region26: #{tpu_custom_call.1} parent=5 // pred_check_branch
        %126 = sbr.rel (%p123) target = $region28
      $region27: #{tpu_custom_call.1} parent=5 // pred_region
        %s127 = ssub.s32 %s9, 1
        // Predicated region
        $region29: #{tpu_custom_call.1} parent=27 // pred_check
          %p128 = pneg %p30
        $region30: #{tpu_custom_call.1} parent=27 // pred_check_branch
          %130 = sbr.rel (%p128) target = $region32
        $region31: #{tpu_custom_call.1} parent=27 // pred_region
          %131 = dma.done [#allocation3], 16
        $region32: #{tpu_custom_call.1} parent=27 // pred_fallthru
          _
        %132 = sfence
        %p133 = pneg %p30
        %p134 = pneg %p27
        %s135 = smul.u32 8, %s14
        %p136 = scmp.lt.s32.totalorder %s135, 31
        %s137 = scalar_select %p136, %s135, 31
        %s138 = smul.addr %s137, 8
        %s139 = scalar_lea.vmem %s1, %s138
        %p140 = pneg %p56
        %p141 = pneg %p53
        %p142 = pneg %p82
        %p143 = pneg %p79
        %s144 = smul.u32 8, %s14
        %p145 = scmp.lt.s32.totalorder %s144, 31
        %s146 = scalar_select %p145, %s144, 31
        %s147 = smul.addr %s146, 8
        %s148 = scalar_lea.vmem %s2, %s147
        %s149 = smul.u32 8, %s14
        %p150 = scmp.lt.s32.totalorder %s149, 31
        %s151 = scalar_select %p150, %s149, 31
        %s152 = smul.addr %s151, 8
        %s153 = scalar_lea.vmem %s1, %s152
        %s154 = smul.u32 8, %s14
        %s155 = smul.u32 8, %s14
        %p156 = scmp.lt.s32.totalorder %s155, 31
        %s157 = scalar_select %p156, %s155, 31
        %s158 = smul.addr %s157, 8
        %s159 = scalar_lea.vmem %s2, %s158
        %s160 = smul.u32 8, %s14
        %s161 = sld [smem:[#allocation2]]
        %s162 = sld [smem:[#allocation2 + $0x1]]
        %v163 = vld [vmem:[%s153] sm:$0xff]
        %v164 = vld [vmem:[%s153 + $0x8] sm:$0xff]
        %v165 = vld [vmem:[%s153 + $0x10] sm:$0xff]
        %v166 = vld [vmem:[%s153 + $0x18] sm:$0xff]
        %v167 = vld [vmem:[%s153 + $0x20] sm:$0xff]
        %v168 = vld [vmem:[%s153 + $0x28] sm:$0xff]
        %v169 = vld [vmem:[%s153 + $0x30] sm:$0xff]
        %v170 = vld [vmem:[%s153 + $0x38] sm:$0xff]
        %v171 = vstv %s161
        %v172 = vmul.f32 %v163, %v171
        %v173 = vmul.f32 %v164, %v171
        %v174 = vmul.f32 %v165, %v171
        %v175 = vmul.f32 %v166, %v171
        %v176 = vmul.f32 %v167, %v171
        %v177 = vmul.f32 %v168, %v171
        %v178 = vmul.f32 %v169, %v171
        %v179 = vmul.f32 %v170, %v171
        %v180 = vstv %s162
        %v181 = vadd.f32 %v172, %v180
        %v182 = vadd.f32 %v173, %v180
        %v183 = vadd.f32 %v174, %v180
        %v184 = vadd.f32 %v175, %v180
        %v185 = vadd.f32 %v176, %v180
        %v186 = vadd.f32 %v177, %v180
        %v187 = vadd.f32 %v178, %v180
        %v188 = vadd.f32 %v179, %v180
        %v189 = vsub.f32 %v181, %v181
        %v190 = vsub.f32 %v182, %v182
        %v191 = vsub.f32 %v183, %v183
        %v192 = vsub.f32 %v184, %v184
        %v193 = vsub.f32 %v185, %v185
        %v194 = vsub.f32 %v186, %v186
        %v195 = vsub.f32 %v187, %v187
        %v196 = vsub.f32 %v188, %v188
        %v197 = vmul.f32 %v189, 1.442695
        %v198 = vpow.pop %v197
        %v199 = vmul.f32 %v190, 1.442695
        %v200 = vpow.pop %v199
        %v201 = vmul.f32 %v191, 1.442695
        %v202 = vpow.pop %v201
        %v203 = vmul.f32 %v192, 1.442695
        %v204 = vpow.pop %v203
        %v205 = vmul.f32 %v193, 1.442695
        %v206 = vpow.pop %v205
        %v207 = vmul.f32 %v194, 1.442695
        %v208 = vpow.pop %v207
        %v209 = vmul.f32 %v195, 1.442695
        %v210 = vpow.pop %v209
        %v211 = vmul.f32 %v196, 1.442695
        %v212 = vpow.pop %v211
        %v213 = vadd.f32 %v198, 0.0
        %v214 = vadd.f32 %v200, 0.0
        %v215 = vadd.f32 %v202, 0.0
        %v216 = vadd.f32 %v204, 0.0
        %v217 = vadd.f32 %v206, 0.0
        %v218 = vadd.f32 %v208, 0.0
        %v219 = vadd.f32 %v210, 0.0
        %v220 = vadd.f32 %v212, 0.0
        %v221 = vlog2.pop %v213
        %v222 = vmul.f32 %v221, 0.6931472
        %v223 = vlog2.pop %v214
        %v224 = vmul.f32 %v223, 0.6931472
        %v225 = vlog2.pop %v215
        %v226 = vmul.f32 %v225, 0.6931472
        %v227 = vlog2.pop %v216
        %v228 = vmul.f32 %v227, 0.6931472
        %v229 = vlog2.pop %v217
        %v230 = vmul.f32 %v229, 0.6931472
        %v231 = vlog2.pop %v218
        %v232 = vmul.f32 %v231, 0.6931472
        %v233 = vlog2.pop %v219
        %v234 = vmul.f32 %v233, 0.6931472
        %v235 = vlog2.pop %v220
        %v236 = vmul.f32 %v235, 0.6931472
        %v237 = vsub.f32 %v189, %v222
        %v238 = vsub.f32 %v190, %v224
        %v239 = vsub.f32 %v191, %v226
        %v240 = vsub.f32 %v192, %v228
        %v241 = vsub.f32 %v193, %v230
        %v242 = vsub.f32 %v194, %v232
        %v243 = vsub.f32 %v195, %v234
        %v244 = vsub.f32 %v196, %v236
        %vm245 = vcmask 7168
        %246 = vst.msk [vmem:[%s159] sm:$0xff] %vm245, %v237
        %247 = vst.msk [vmem:[%s159 + $0x8] sm:$0xff] %vm245, %v238
        %248 = vst.msk [vmem:[%s159 + $0x10] sm:$0xff] %vm245, %v239
        %249 = vst.msk [vmem:[%s159 + $0x18] sm:$0xff] %vm245, %v240
        %250 = vst.msk [vmem:[%s159 + $0x20] sm:$0xff] %vm245, %v241
        %251 = vst.msk [vmem:[%s159 + $0x28] sm:$0xff] %vm245, %v242
        %252 = vst.msk [vmem:[%s159 + $0x30] sm:$0xff] %vm245, %v243
        %253 = vst.msk [vmem:[%s159 + $0x38] sm:$0xff] %vm245, %v244
        %s254 = smul.u32 8, %s14
        %p255 = scmp.lt.s32.totalorder %s254, 31
        %s256 = scalar_select %p255, %s254, 31
        %s257 = smul.addr %s256, 8
        %s258 = scalar_lea.vmem %s2, %s257
        // Predicated region
        $region33: #{tpu_custom_call.1} parent=27 // pred_check
          %p259 = pneg %p79
        $region34: #{tpu_custom_call.1} parent=27 // pred_check_branch
          %261 = sbr.rel (%p259) target = $region36
        $region35: #{tpu_custom_call.1} parent=27 // pred_region
          %s262 = smul.u32 8, %s14
        $region36: #{tpu_custom_call.1} parent=27 // pred_fallthru
          _
      $region28: #{tpu_custom_call.1} parent=5 // pred_fallthru
        _
      %p263 = scmp.le.s32.totalorder 2, %s9
      // Predicated region
      $region37: #{tpu_custom_call.1} parent=5 // pred_check
        %p264 = pneg %p263
      $region38: #{tpu_custom_call.1} parent=5 // pred_check_branch
        %266 = sbr.rel (%p264) target = $region40
      $region39: #{tpu_custom_call.1} parent=5 // pred_region
        %s267 = ssub.s32 %s9, 2
        // Predicated region
        $region41: #{tpu_custom_call.1} parent=39 // pred_check
          %p268 = pneg %p85
        $region42: #{tpu_custom_call.1} parent=39 // pred_check_branch
          %270 = sbr.rel (%p268) target = $region44
        $region43: #{tpu_custom_call.1} parent=39 // pred_region
          %s271 = smul.u32 8, %s15
          %p272 = scmp.lt.s32.totalorder %s271, 31
          %s273 = scalar_select %p272, %s271, 31
          %s274 = smul.addr %s273, 8
          %s275 = scalar_lea.vmem %s2, %s274
        $region44: #{tpu_custom_call.1} parent=39 // pred_fallthru
          _
      $region40: #{tpu_custom_call.1} parent=5 // pred_fallthru
        _
    $region6: #{tpu_custom_call.1} parent=1 // loop_footer
      %s13 = sadd.s32 1, %s9
    $region7: #{tpu_custom_call.1} parent=1 // loop_footer_branch
      %8 = sbr.rel target = $region3
    $region8: #{tpu_custom_call.1} parent=1 // loop_exit
      _
    %276 = vsyncpa [#allocation3], 1
    %s277 = scalar_lea.sflag [#allocation3], 1
    %278 = vsyncpa %s277, 1

</llo_original>
